<compile_context>
chip_gen: v6e
topology: v6e:2x2x1
jax: 0.10.0
libtpu: 0.0.40
codegen_flags: <defaults>
</compile_context>

<pallas_src>
import jax
import jax.numpy as jnp
from jax.experimental import pallas as pl
from jax.experimental.pallas import tpu as pltpu


def _mlp_kernel(x_ref, w1_ref, b1_ref, w2_ref, b2_ref, o_ref):
    # Cast the streamed x tile to the (bf16) weight dtype *inside* the kernel:
    # HBM traffic stays in x's native dtype, the cast rides the VPU for free.
    x = x_ref[...].astype(w1_ref.dtype)
    # fc1 on the MXU with f32 accumulation; bias + ReLU stay in f32 (v5e's VPU
    # has no bf16 path).
    h = jnp.dot(x, w1_ref[...], preferred_element_type=jnp.float32)
    h = jnp.maximum(h + b1_ref[...], 0.0)
    # fc2: activations back to the weight dtype for the MXU, f32 accumulate.
    y = jnp.dot(h.astype(w2_ref.dtype), w2_ref[...],
                preferred_element_type=jnp.float32)
    # The pack factor is folded into the weights, so the output block is already
    # lane-dense (tb, 128): plain full-width store, no in-kernel reshape/relayout.
    o_ref[...] = (y + b2_ref[...]).astype(o_ref.dtype)


def _device_hints():
    """Return (vmem_limit_cap_bytes, tensorcore_count) for the local TPU."""
    kind = ""
    try:
        kind = jax.devices()[0].device_kind.lower()
    except Exception:
        pass
    # v2-v6 devices expose one TensorCore and 128 MiB VMEM -> generous cap.
    if any(tag in kind for tag in ("v2", "v3", "v4", "v5", "v6")):
        return (100 << 20), 1
    # v7x (and unknown): 64 MiB physical VMEM per TC, leave headroom; 2 TCs.
    return (48 << 20), 2


def _pick_batch_tile(total_rows, budget_rows, num_cores, unit=8):
    """Batch-tile size (rows of the packed view) for the streamed grid axis.

    Picks the largest tile that fits the VMEM-row budget while keeping the step
    count a multiple of the TensorCore count (v7x megacore) with near-equal
    tiles.  Single-TC chips never get a useless forced split.
    """
    budget_rows = max(unit, (budget_rows // unit) * unit)
    min_steps = num_cores if total_rows > unit else 1
    steps = max(min_steps, -(-total_rows // budget_rows))          # ceil
    if num_cores > 1 and steps % num_cores:
        steps += num_cores - (steps % num_cores)                   # even steps
    tb = -(-total_rows // steps)                                   # ceil
    tb = -(-tb // unit) * unit                                     # 8-row unit
    if tb >= total_rows:
        return total_rows                                          # full dim ok
    return tb


def snn_feature_extractor(x, w1, b1, w2, b2, *, compute_dtype=jnp.bfloat16,
                          out_dtype=None):
    """Forward pass of SNNFeatureExtractor: fc2(relu(fc1(x))).

    x : [B, input_size]
    w1: [hidden, input]  (PyTorch layout),  b1: [hidden]
    w2: [output, hidden],                   b2: [output]
    Returns [B, output] in `out_dtype` (default x.dtype; pass jnp.bfloat16 to
    halve write traffic in this memory-bound kernel).
    """
    B, in_f = x.shape
    hid = w1.shape[0]
    out_f = w2.shape[0]
    out_dtype = x.dtype if out_dtype is None else out_dtype

    vmem_cap, num_cores = _device_hints()

    # ---- Lane-dense packing folded into the weights (no in-kernel reshape). --
    # View x row-major as (B/p, p*in_f) (free) and use block-diagonal weights
    # so the kernel's output block is (tb, p*out_f) with p*out_f == 128.
    pack = 1
    if out_f < 128 and 128 % out_f == 0 and B % (128 // out_f) == 0:
        pack = 128 // out_f

    w1_t = w1.T.astype(jnp.float32)                       # [in_f, hid]
    w2_t = w2.T.astype(jnp.float32)                       # [hid, out_f]
    if pack > 1:
        eye = jnp.eye(pack, dtype=jnp.float32)
        w1_t = jnp.kron(eye, w1_t)                        # [p*in_f, p*hid]
        w2_t = jnp.kron(eye, w2_t)                        # [p*hid, p*out_f]
    w1_c = w1_t.astype(compute_dtype)
    w2_c = w2_t.astype(compute_dtype)
    b1_r = jnp.tile(b1.astype(jnp.float32), pack).reshape(1, pack * hid)
    b2_r = jnp.tile(b2.astype(jnp.float32), pack).reshape(1, pack * out_f)

    # x stays in its native dtype: no wrapper-side convert pass over HBM,
    # only a free row-major view.
    x_v = x.reshape(B // pack, pack * in_f)

    rows = B // pack                                      # packed-view rows
    in_cols, hid_cols, out_cols = pack * in_f, pack * hid, pack * out_f

    # ---- VMEM accounting per packed row, including in-kernel intermediates. --
    x_item = jnp.dtype(x.dtype).itemsize
    o_item = jnp.dtype(out_dtype).itemsize
    c_item = jnp.dtype(compute_dtype).itemsize
    bytes_per_row = (
        2 * in_cols * x_item          # streamed x tile (double-buffered)
        + in_cols * c_item            # in-kernel bf16 copy of x
        + hid_cols * 4                # f32 hidden activation
        + hid_cols * c_item           # bf16 copy of hidden for fc2
        + out_cols * 4                # f32 y before the final cast
        + 2 * out_cols * o_item)      # streamed out tile (double-buffered)
    resident_bytes = (2 * (w1_c.size + w2_c.size) * c_item
                      + 2 * (b1_r.size + b2_r.size) * 4)

    budget_rows = max(8, (int(vmem_cap * 0.7) - resident_bytes) // bytes_per_row)
    tb = _pick_batch_tile(rows, budget_rows, num_cores)
    grid = (pl.cdiv(rows, tb),)

    vmem_needed = tb * bytes_per_row + resident_bytes
    vmem_limit = int(min(vmem_cap,
                         max(32 << 20, int(1.5 * vmem_needed) + (4 << 20))))

    # Resident operands (<1 MiB total): constant index_map, default buffering.
    def resident(shape):
        return pl.BlockSpec(shape, lambda i: (0, 0))

    out_packed = pl.pallas_call(
        _mlp_kernel,
        out_shape=jax.ShapeDtypeStruct((rows, out_cols), out_dtype),
        grid_spec=pltpu.PrefetchScalarGridSpec(
            num_scalar_prefetch=0,
            grid=grid,
            in_specs=[
                pl.BlockSpec((tb, in_cols), lambda i: (i, 0)),   # streamed x
                resident((in_cols, hid_cols)),                   # kron(I, W1^T)
                resident((1, hid_cols)),                         # tiled b1
                resident((hid_cols, out_cols)),                  # kron(I, W2^T)
                resident((1, out_cols)),                         # tiled b2
            ],
            out_specs=pl.BlockSpec((tb, out_cols), lambda i: (i, 0)),
        ),
        compiler_params=pltpu.CompilerParams(
            dimension_semantics=("parallel",),
            vmem_limit_bytes=vmem_limit),
    )(x_v, w1_c, b1_r, w2_c, b2_r)

    # Free row-major view back to [B, out_f].
    return out_packed.reshape(B, out_f)


def _init_linear(key, out_features, in_features, dtype=jnp.float32):
    # Deterministic init mimicking PyTorch nn.Linear default:
    # U(-1/sqrt(in), 1/sqrt(in)) for both weight and bias.
    kw, kb = jax.random.split(key)
    bound = 1.0 / jnp.sqrt(jnp.asarray(in_features, dtype))
    w = jax.random.uniform(kw, (out_features, in_features), dtype,
                           minval=-bound, maxval=bound)
    b = jax.random.uniform(kb, (out_features,), dtype,
                           minval=-bound, maxval=bound)
    return w, b


def _reference_bf16(x, w1, b1, w2, b2):
    # Matches the kernel's numerics: bf16 operands, f32 accumulation.
    xb = x.astype(jnp.bfloat16)
    h = jnp.dot(xb, w1.T.astype(jnp.bfloat16),
                preferred_element_type=jnp.float32) + b1
    h = jnp.maximum(h, 0.0)
    return jnp.dot(h.astype(jnp.bfloat16), w2.T.astype(jnp.bfloat16),
                   preferred_element_type=jnp.float32) + b2


if __name__ == "__main__":
    input_size, hidden_size, output_size = 32, 64, 16
    key = jax.random.PRNGKey(0)
    kx, k1, k2, kx2 = jax.random.split(key, 4)

    w1, b1 = _init_linear(k1, hidden_size, input_size)
    w2, b2 = _init_linear(k2, output_size, hidden_size)

    # Main case: batch is a multiple of the lane-pack factor (128 // out_f = 8).
    batch = 128
    x = jax.random.normal(kx, (batch, input_size), jnp.float32)
    out = snn_feature_extractor(x, w1, b1, w2, b2)
    jax.block_until_ready(out)
    assert out.shape == (batch, output_size)

    # Reference 1: exact f32 forward (same math as the PyTorch module); loose
    # tolerance because the kernel uses bf16 operands (f32 accumulate).
    ref_f32 = jnp.maximum(x @ w1.T + b1, 0.0) @ w2.T + b2
    assert jnp.allclose(out, ref_f32, atol=5e-2, rtol=5e-2), \
        float(jnp.max(jnp.abs(out - ref_f32)))

    # Reference 2: bf16-operand / f32-accumulate forward -- should agree tightly.
    ref_bf = _reference_bf16(x, w1, b1, w2, b2)
    assert jnp.allclose(out, ref_bf, atol=2e-3, rtol=2e-3), \
        float(jnp.max(jnp.abs(out - ref_bf)))

    # Ragged case: packed row count (136/8 = 17) is not a multiple of the batch
    # tile, exercising the partial-last-block writeback path.
    batch2 = 136
    x2 = jax.random.normal(kx2, (batch2, input_size), jnp.float32)
    out2 = snn_feature_extractor(x2, w1, b1, w2, b2)
    jax.block_until_ready(out2)
    assert out2.shape == (batch2, output_size)
    ref2 = _reference_bf16(x2, w1, b1, w2, b2)
    assert jnp.allclose(out2, ref2, atol=2e-3, rtol=2e-3), \
        float(jnp.max(jnp.abs(out2 - ref2)))

    print("KERNEL_OK")
</pallas_src>

<mosaic_0001>
module attributes {stable_mosaic.version = 11 : i64} {
  func.func @_mlp_kernel(%arg0: i32, %arg1: memref<8x256xf32, #tpu.memory_space<vmem>>, %arg2: memref<256x512xbf16, #tpu.memory_space<vmem>>, %arg3: memref<1x512xf32, #tpu.memory_space<vmem>>, %arg4: memref<512x128xbf16, #tpu.memory_space<vmem>>, %arg5: memref<1x128xf32, #tpu.memory_space<vmem>>, %arg6: memref<8x128xf32, #tpu.memory_space<vmem>>) attributes {dimension_semantics = [#tpu.dimension_semantics<parallel>], iteration_bounds = array<i64: 2>, scalar_prefetch = 0 : i64, scratch_operands = 0 : i64, tpu.core_type = #tpu.core_type<tc>, window_params = [{transform_indices = @transform_0, window_bounds = array<i64: 8, 256>}, {pipeline_mode = #tpu.pipeline_mode<synchronous>, transform_indices = @transform_1, window_bounds = array<i64: 256, 512>}, {pipeline_mode = #tpu.pipeline_mode<synchronous>, transform_indices = @transform_2, window_bounds = array<i64: 1, 512>}, {pipeline_mode = #tpu.pipeline_mode<synchronous>, transform_indices = @transform_3, window_bounds = array<i64: 512, 128>}, {pipeline_mode = #tpu.pipeline_mode<synchronous>, transform_indices = @transform_4, window_bounds = array<i64: 1, 128>}, {transform_indices = @transform_5, window_bounds = array<i64: 8, 128>}]} {
    %c0 = arith.constant 0 : index
    %c0_0 = arith.constant 0 : index
    %0 = vector.load %arg1[%c0, %c0_0] : memref<8x256xf32, #tpu.memory_space<vmem>>, vector<8x256xf32>
    %1 = arith.truncf %0 : vector<8x256xf32> to vector<8x256xbf16>
    %c0_1 = arith.constant 0 : index
    %c0_2 = arith.constant 0 : index
    %2 = vector.load %arg2[%c0_1, %c0_2] : memref<256x512xbf16, #tpu.memory_space<vmem>>, vector<256x512xbf16>
    %cst = arith.constant dense<0.000000e+00> : vector<8x512xf32>
    %3 = tpu.matmul %1, %2, %cst {dimension_numbers = #tpu.dot_dimension_numbers<[1], [0], [0], [1], [0, 0, 1, 1], [], []>} : vector<8x256xbf16>, vector<256x512xbf16>, vector<8x512xf32> -> vector<8x512xf32>
    %c0_3 = arith.constant 0 : index
    %c0_4 = arith.constant 0 : index
    %4 = vector.load %arg3[%c0_3, %c0_4] : memref<1x512xf32, #tpu.memory_space<vmem>>, vector<1x512xf32>
    %5 = vector.broadcast %4 : vector<1x512xf32> to vector<8x512xf32>
    %6 = arith.addf %3, %5 : vector<8x512xf32>
    %cst_5 = arith.constant 0.000000e+00 : f32
    %7 = vector.broadcast %cst_5 : f32 to vector<8x512xf32>
    %8 = arith.maximumf %6, %7 : vector<8x512xf32>
    %9 = arith.truncf %8 : vector<8x512xf32> to vector<8x512xbf16>
    %c0_6 = arith.constant 0 : index
    %c0_7 = arith.constant 0 : index
    %10 = vector.load %arg4[%c0_6, %c0_7] : memref<512x128xbf16, #tpu.memory_space<vmem>>, vector<512x128xbf16>
    %cst_8 = arith.constant dense<0.000000e+00> : vector<8x128xf32>
    %11 = tpu.matmul %9, %10, %cst_8 {dimension_numbers = #tpu.dot_dimension_numbers<[1], [0], [0], [1], [0, 0, 1, 1], [], []>} : vector<8x512xbf16>, vector<512x128xbf16>, vector<8x128xf32> -> vector<8x128xf32>
    %c0_9 = arith.constant 0 : index
    %c0_10 = arith.constant 0 : index
    %12 = vector.load %arg5[%c0_9, %c0_10] : memref<1x128xf32, #tpu.memory_space<vmem>>, vector<1x128xf32>
    %13 = vector.broadcast %12 : vector<1x128xf32> to vector<8x128xf32>
    %14 = arith.addf %11, %13 : vector<8x128xf32>
    %c0_11 = arith.constant 0 : index
    %c0_12 = arith.constant 0 : index
    %15 = vector.load %arg6[%c0_11, %c0_12] : memref<8x128xf32, #tpu.memory_space<vmem>>, vector<8x128xf32>
    tpu.vector_store %arg6[%c0_11, %c0_12], %14 {strides = array<i32>} : memref<8x128xf32, #tpu.memory_space<vmem>>, vector<8x128xf32>,
    return
  }
  func.func @transform_0(%arg0: i32) -> (i32, i32) {
    %c0_i32 = arith.constant 0 : i32
    %c0_i32_0 = arith.constant 0 : i32
    return %arg0, %c0_i32 : i32, i32
  }
  func.func @transform_1(%arg0: i32) -> (i32, i32) {
    %c0_i32 = arith.constant 0 : i32
    %c0_i32_0 = arith.constant 0 : i32
    %c0_i32_1 = arith.constant 0 : i32
    return %c0_i32, %c0_i32_0 : i32, i32
  }
  func.func @transform_2(%arg0: i32) -> (i32, i32) {
    %c0_i32 = arith.constant 0 : i32
    %c0_i32_0 = arith.constant 0 : i32
    %c0_i32_1 = arith.constant 0 : i32
    return %c0_i32, %c0_i32_0 : i32, i32
  }
  func.func @transform_3(%arg0: i32) -> (i32, i32) {
    %c0_i32 = arith.constant 0 : i32
    %c0_i32_0 = arith.constant 0 : i32
    %c0_i32_1 = arith.constant 0 : i32
    return %c0_i32, %c0_i32_0 : i32, i32
  }
  func.func @transform_4(%arg0: i32) -> (i32, i32) {
    %c0_i32 = arith.constant 0 : i32
    %c0_i32_0 = arith.constant 0 : i32
    %c0_i32_1 = arith.constant 0 : i32
    return %c0_i32, %c0_i32_0 : i32, i32
  }
  func.func @transform_5(%arg0: i32) -> (i32, i32) {
    %c0_i32 = arith.constant 0 : i32
    %c0_i32_0 = arith.constant 0 : i32
    return %arg0, %c0_i32 : i32, i32
  }
}

</mosaic_0001>

<llo_original>
// kernel: tpu_custom_call.1
$region0: #{tpu_custom_call.1}
  #allocation0 [shape = 'u32[]', space=smem, size = 0x4, offset = 0x4, fixed_abs, tag = 'smem constant byte address 0x4 - core index']
  #allocation1 [shape = 'u32[144,128]{1,0:T(1,128)}', space=vmem, size = 0x12000, scoped, tag = 'internal scratch']
  %s0 = inlined_call_operand.hbm [shape: f32[16,256], index: 0, kind: input, shape index: {}]
  %s1 = inlined_call_operand.hbm [shape: bf16[256,512], index: 1, kind: input, shape index: {}]
  %s2 = inlined_call_operand.hbm [shape: f32[1,512], index: 2, kind: input, shape index: {}]
  %s3 = inlined_call_operand.hbm [shape: bf16[512,128], index: 3, kind: input, shape index: {}]
  %s4 = inlined_call_operand.vmem [shape: f32[1,128], index: 4, kind: input, shape index: {}]
  %s5 = inlined_call_operand.hbm [shape: f32[16,128], index: 5, kind: output, shape index: {}]
  %s6 = sld [smem:[#allocation0]]
  $region69: #{tpu_custom_call.1} parent=0
    _
  %s8 = ssub.s32 1, %s6
  %s9 = scalar_select 0, %s8, %s6
  $region1: #{tpu_custom_call.1} parent=0
    #allocation2 [shape = 'u8[16384]{0}', space=vmem, size = 0x4000, scoped, tag = 'input window, operand 0']
    #allocation3 [shape = 's32[2]{0}', space=sflag, size = 0x8, scoped, tag = 'scoped memory for tpu_custom_call.1']
    #allocation4 [shape = 's32[2]{0}', space=sflag, size = 0x8, scoped, tag = 'scoped memory for tpu_custom_call.1']
    #allocation5 [shape = 'u8[262144]{0}', space=vmem, size = 0x40000, scoped, tag = 'input window, operand 1, single buffered']
    #allocation6 [shape = 's32[1]{0}', space=sflag, size = 0x4, scoped, tag = 'scoped memory for tpu_custom_call.1']
    #allocation7 [shape = 'u8[2048]{0}', space=vmem, size = 0x800, scoped, tag = 'input window, operand 2, single buffered']
    #allocation8 [shape = 'u8[131072]{0}', space=vmem, size = 0x20000, scoped, tag = 'input window, operand 3, single buffered']
    #allocation9 [shape = 's32[1]{0}', space=sflag, size = 0x4, scoped, tag = 'scoped memory for tpu_custom_call.1']
    #allocation10 [shape = 'u8[8192]{0}', space=vmem, size = 0x2000, scoped, tag = 'output window, operand 0']
    %10 = vsyncpa [#allocation3], 0
    %s11 = scalar_lea.sflag [#allocation3], 1
    %12 = vsyncpa %s11, 0
    %13 = vsyncpa [#allocation6], 0
    %14 = vsyncpa [#allocation9], 0
    %15 = vsyncpa [#allocation4], 0
    %s16 = scalar_lea.sflag [#allocation4], 1
    %17 = vsyncpa %s16, 0
    loop: start=0, step=1, limit=4
    $region2: #{tpu_custom_call.1} parent=1 // loop_pre_header
      _
    $region3: #{tpu_custom_call.1} parent=1 // loop_header
      %s19 = sphi 0, %s23
      %p20 = scmp.ge.s32.totalorder %s19, 4
      %s29 = sphi 0, %s31
      %s32 = sphi 0, %s29
      %s33 = sphi 0, %s32
      %s49 = sphi 0, %s33
      %s53 = sphi 0, %s53
      %s55 = sphi 0, %s53
      %s56 = sphi 0, %s55
      %s70 = sphi 0, %s56
      %s74 = sphi 0, %s74
      %s76 = sphi 0, %s74
      %s77 = sphi 0, %s76
      %s91 = sphi 0, %s77
      %s95 = sphi 0, %s95
      %s97 = sphi 0, %s95
      %s98 = sphi 0, %s97
      %s112 = sphi 0, %s98
      %s116 = sphi 0, %s116
      %s118 = sphi 0, %s116
      %s119 = sphi 0, %s118
      %s133 = sphi 0, %s119
      %s139 = sphi 0, %s141
      %s142 = sphi 0, %s139
      %s143 = sphi 0, %s142
      %s159 = sphi 0, %s143
    $region4: #{tpu_custom_call.1} parent=1 // loop_header_branch
      %22 = sbr.rel (%p20) target = $region8
    $region5: #{tpu_custom_call.1} parent=1 // loop_body
      %s24 = ssub.s32 %s19, 1
      %s25 = ssub.s32 %s19, 2
      %s26 = sadd.s32 %s19, 1
      %s27 = ssub.s32 %s19, %s26
      %p28 = scmp.eq.s32.totalorder %s27, 0
      %s30 = sadd.s32 %s29, 1
      %s31 = scalar_select %p28, %s29, %s30
      %p34 = pneg %p28
      %p35 = scmp.eq.s32.totalorder %s19, 1
      %p36 = por %p34, %p35
      %p37 = scmp.ne.s32.totalorder %s29, %s32
      %p38 = scmp.eq.s32.totalorder %s19, 0
      %p39 = por %p37, %p38
      %p40 = scmp.ne.s32.totalorder %s29, %s32
      %p41 = scmp.eq.s32.totalorder %s24, 1
      %p42 = por %p40, %p41
      %p43 = scmp.ne.s32.totalorder %s32, %s33
      %p44 = scmp.eq.s32.totalorder %s24, 0
      %p45 = por %p43, %p44
      %p46 = scmp.ne.s32.totalorder %s32, %s33
      %p47 = scmp.eq.s32.totalorder %s25, 1
      %p48 = por %p46, %p47
      %p50 = scmp.ne.s32.totalorder %s33, %s49
      %p51 = scmp.eq.s32.totalorder %s25, 0
      %p52 = por %p50, %p51
      %s54 = sadd.s32 %s53, 1
      %p57 = scmp.eq.s32.totalorder %s19, 1
      %p58 = scmp.ne.s32.totalorder %s53, %s55
      %p59 = scmp.eq.s32.totalorder %s19, 0
      %p60 = por %p58, %p59
      %p61 = scmp.ne.s32.totalorder %s53, %s55
      %p62 = scmp.eq.s32.totalorder %s24, 1
      %p63 = por %p61, %p62
      %p64 = scmp.ne.s32.totalorder %s55, %s56
      %p65 = scmp.eq.s32.totalorder %s24, 0
      %p66 = por %p64, %p65
      %p67 = scmp.ne.s32.totalorder %s55, %s56
      %p68 = scmp.eq.s32.totalorder %s25, 1
      %p69 = por %p67, %p68
      %p71 = scmp.ne.s32.totalorder %s56, %s70
      %p72 = scmp.eq.s32.totalorder %s25, 0
      %p73 = por %p71, %p72
      %s75 = sadd.s32 %s74, 1
      %p78 = scmp.eq.s32.totalorder %s19, 1
      %p79 = scmp.ne.s32.totalorder %s74, %s76
      %p80 = scmp.eq.s32.totalorder %s19, 0
      %p81 = por %p79, %p80
      %p82 = scmp.ne.s32.totalorder %s74, %s76
      %p83 = scmp.eq.s32.totalorder %s24, 1
      %p84 = por %p82, %p83
      %p85 = scmp.ne.s32.totalorder %s76, %s77
      %p86 = scmp.eq.s32.totalorder %s24, 0
      %p87 = por %p85, %p86
      %p88 = scmp.ne.s32.totalorder %s76, %s77
      %p89 = scmp.eq.s32.totalorder %s25, 1
      %p90 = por %p88, %p89
      %p92 = scmp.ne.s32.totalorder %s77, %s91
      %p93 = scmp.eq.s32.totalorder %s25, 0
      %p94 = por %p92, %p93
      %s96 = sadd.s32 %s95, 1
      %p99 = scmp.eq.s32.totalorder %s19, 1
      %p100 = scmp.ne.s32.totalorder %s95, %s97
      %p101 = scmp.eq.s32.totalorder %s19, 0
      %p102 = por %p100, %p101
      %p103 = scmp.ne.s32.totalorder %s95, %s97
      %p104 = scmp.eq.s32.totalorder %s24, 1
      %p105 = por %p103, %p104
      %p106 = scmp.ne.s32.totalorder %s97, %s98
      %p107 = scmp.eq.s32.totalorder %s24, 0
      %p108 = por %p106, %p107
      %p109 = scmp.ne.s32.totalorder %s97, %s98
      %p110 = scmp.eq.s32.totalorder %s25, 1
      %p111 = por %p109, %p110
      %p113 = scmp.ne.s32.totalorder %s98, %s112
      %p114 = scmp.eq.s32.totalorder %s25, 0
      %p115 = por %p113, %p114
      %s117 = sadd.s32 %s116, 1
      %p120 = scmp.eq.s32.totalorder %s19, 1
      %p121 = scmp.ne.s32.totalorder %s116, %s118
      %p122 = scmp.eq.s32.totalorder %s19, 0
      %p123 = por %p121, %p122
      %p124 = scmp.ne.s32.totalorder %s116, %s118
      %p125 = scmp.eq.s32.totalorder %s24, 1
      %p126 = por %p124, %p125
      %p127 = scmp.ne.s32.totalorder %s118, %s119
      %p128 = scmp.eq.s32.totalorder %s24, 0
      %p129 = por %p127, %p128
      %p130 = scmp.ne.s32.totalorder %s118, %s119
      %p131 = scmp.eq.s32.totalorder %s25, 1
      %p132 = por %p130, %p131
      %p134 = scmp.ne.s32.totalorder %s119, %s133
      %p135 = scmp.eq.s32.totalorder %s25, 0
      %p136 = por %p134, %p135
      %s137 = ssub.s32 %s19, %s26
      %p138 = scmp.eq.s32.totalorder %s137, 0
      %s140 = sadd.s32 %s139, 1
      %s141 = scalar_select %p138, %s139, %s140
      %p144 = pneg %p138
      %p145 = scmp.eq.s32.totalorder %s19, 1
      %p146 = por %p144, %p145
      %p147 = scmp.ne.s32.totalorder %s139, %s142
      %p148 = scmp.eq.s32.totalorder %s19, 0
      %p149 = por %p147, %p148
      %p150 = scmp.ne.s32.totalorder %s139, %s142
      %p151 = scmp.eq.s32.totalorder %s24, 1
      %p152 = por %p150, %p151
      %p153 = scmp.ne.s32.totalorder %s142, %s143
      %p154 = scmp.eq.s32.totalorder %s24, 0
      %p155 = por %p153, %p154
      %p156 = scmp.ne.s32.totalorder %s142, %s143
      %p157 = scmp.eq.s32.totalorder %s25, 1
      %p158 = por %p156, %p157
      %p160 = scmp.ne.s32.totalorder %s143, %s159
      %p161 = scmp.eq.s32.totalorder %s25, 0
      %p162 = por %p160, %p161
      %p163 = scmp.le.s32.totalorder 1, %s19
      %p164 = scmp.lt.s32.totalorder %s19, 3
      %p165 = pnand %p163, %p164
      %p166 = pneg %p165
      // Predicated region
      $region9: #{tpu_custom_call.1} parent=5 // pred_check
        _
      $region10: #{tpu_custom_call.1} parent=5 // pred_check_branch
        %168 = sbr.rel (%p165) target = $region12
      $region11: #{tpu_custom_call.1} parent=5 // pred_region
        %s169 = ssub.s32 %s19, 1
        // Predicated region
        $region13: #{tpu_custom_call.1} parent=11 // pred_check
          %p170 = pneg %p66
        $region14: #{tpu_custom_call.1} parent=11 // pred_check_branch
          %172 = sbr.rel (%p170) target = $region16
        $region15: #{tpu_custom_call.1} parent=11 // pred_region
          %s174 = ssub.s32 8192, 8192
          %175 = vsyncadd [#allocation6], %s174
          %s176 = sshll.u32 [#allocation5], 4
          %s177 = int_to_ptr.vmem [resolvable:$true] %s176
          %182 = dma.hbm_to_vmem [thread:$0]  %s1, 8192, %s177, [#allocation6], 256, 256, 16
        $region16: #{tpu_custom_call.1} parent=11 // pred_fallthru
          _
        // Predicated region
        $region17: #{tpu_custom_call.1} parent=11 // pred_check
          %p183 = pneg %p87
        $region18: #{tpu_custom_call.1} parent=11 // pred_check_branch
          %185 = sbr.rel (%p183) target = $region20
        $region19: #{tpu_custom_call.1} parent=11 // pred_region
          %s187 = ssub.s32 64, 64
          %188 = vsyncadd [#allocation6], %s187
          %s190 = sshll.u32 [#allocation7], 4
          %s191 = int_to_ptr.vmem [resolvable:$true] %s190
          %193 = dma.hbm_to_vmem [thread:$0]  %s2, 64, %s191, [#allocation6]
        $region20: #{tpu_custom_call.1} parent=11 // pred_fallthru
          _
        // Predicated region
        $region21: #{tpu_custom_call.1} parent=11 // pred_check
          %p194 = pneg %p108
        $region22: #{tpu_custom_call.1} parent=11 // pred_check_branch
          %196 = sbr.rel (%p194) target = $region24
        $region23: #{tpu_custom_call.1} parent=11 // pred_region
          %s198 = ssub.s32 4096, 4096
          %199 = vsyncadd [#allocation9], %s198
          %s200 = sshll.u32 [#allocation8], 4
          %s201 = int_to_ptr.vmem [resolvable:$true] %s200
          %206 = dma.hbm_to_vmem [thread:$0]  %s3, 4096, %s201, [#allocation9], 64, 64, 4
        $region24: #{tpu_custom_call.1} parent=11 // pred_fallthru
          _
        // Predicated region
        $region25: #{tpu_custom_call.1} parent=11 // pred_check
          %p207 = pneg %p129
        $region26: #{tpu_custom_call.1} parent=11 // pred_check_branch
          %209 = sbr.rel (%p207) target = $region28
        $region27: #{tpu_custom_call.1} parent=11 // pred_region
          _
        $region28: #{tpu_custom_call.1} parent=11 // pred_fallthru
          _
      $region12: #{tpu_custom_call.1} parent=5 // pred_fallthru
        _
      %p210 = scmp.lt.s32.totalorder %s19, 2
      // Predicated region
      $region29: #{tpu_custom_call.1} parent=5 // pred_check
        %p211 = pneg %p210
      $region30: #{tpu_custom_call.1} parent=5 // pred_check_branch
        %213 = sbr.rel (%p211) target = $region32
      $region31: #{tpu_custom_call.1} parent=5 // pred_region
        // Predicated region
        $region33: #{tpu_custom_call.1} parent=31 // pred_check
          %p214 = pneg %p39
        $region34: #{tpu_custom_call.1} parent=31 // pred_check_branch
          %216 = sbr.rel (%p214) target = $region36
        $region35: #{tpu_custom_call.1} parent=31 // pred_region
          %s217 = sand.u32 %s29, 1
          %s218 = scalar_lea.sflag [#allocation3], %s217
          %s219 = sand.u32 %s29, 1
          %s220 = smul.addr %s219, 16
          %s221 = scalar_lea.vmem [#allocation2], %s220
          %s223 = ssub.s32 256, 256
          %224 = vsyncadd %s218, %s223
          %s225 = smul.addr %s19, 2
          %s226 = smul.addr %s225, 128
          %s227 = scalar_lea.hbm %s0, %s226
          %s229 = sshll.u32 %s221, 4
          %s230 = int_to_ptr.vmem [resolvable:$true] %s229
          %232 = dma.hbm_to_vmem [thread:$0]  %s227, 256, %s230, %s218
        $region36: #{tpu_custom_call.1} parent=31 // pred_fallthru
          _
      $region32: #{tpu_custom_call.1} parent=5 // pred_fallthru
        _
      %p233 = scmp.le.s32.totalorder 1, %s19
      %p234 = scmp.lt.s32.totalorder %s19, 3
      %p235 = pnand %p233, %p234
      %p236 = pneg %p235
      // Predicated region
      $region37: #{tpu_custom_call.1} parent=5 // pred_check
        _
      $region38: #{tpu_custom_call.1} parent=5 // pred_check_branch
        %238 = sbr.rel (%p235) target = $region40
      $region39: #{tpu_custom_call.1} parent=5 // pred_region
        %s239 = ssub.s32 %s19, 1
        %s240 = sand.u32 %s32, 1
        %s241 = scalar_lea.sflag [#allocation3], %s240
        %s242 = sand.u32 %s32, 1
        %s243 = smul.addr %s242, 16
        %s244 = scalar_lea.vmem [#allocation2], %s243
        // Predicated region
        $region41: #{tpu_custom_call.1} parent=39 // pred_check
          %p245 = pneg %p45
        $region42: #{tpu_custom_call.1} parent=39 // pred_check_branch
          %247 = sbr.rel (%p245) target = $region44
        $region43: #{tpu_custom_call.1} parent=39 // pred_region
          %248 = dma.done %s241, 256
        $region44: #{tpu_custom_call.1} parent=39 // pred_fallthru
          _
        // Predicated region
        $region45: #{tpu_custom_call.1} parent=39 // pred_check
          %p249 = pneg %p66
        $region46: #{tpu_custom_call.1} parent=39 // pred_check_branch
          %251 = sbr.rel (%p249) target = $region48
        $region47: #{tpu_custom_call.1} parent=39 // pred_region
          %252 = dma.done [#allocation6], 8192
        $region48: #{tpu_custom_call.1} parent=39 // pred_fallthru
          _
        // Predicated region
        $region49: #{tpu_custom_call.1} parent=39 // pred_check
          %p253 = pneg %p87
        $region50: #{tpu_custom_call.1} parent=39 // pred_check_branch
          %255 = sbr.rel (%p253) target = $region52
        $region51: #{tpu_custom_call.1} parent=39 // pred_region
          %256 = dma.done [#allocation6], 64
        $region52: #{tpu_custom_call.1} parent=39 // pred_fallthru
          _
        // Predicated region
        $region53: #{tpu_custom_call.1} parent=39 // pred_check
          %p257 = pneg %p108
        $region54: #{tpu_custom_call.1} parent=39 // pred_check_branch
          %259 = sbr.rel (%p257) target = $region56
        $region55: #{tpu_custom_call.1} parent=39 // pred_region
          %260 = dma.done [#allocation9], 4096
        $region56: #{tpu_custom_call.1} parent=39 // pred_fallthru
          _
        %s261 = sand.u32 %s32, 1
        %s262 = scalar_lea.sflag [#allocation3], %s261
        %s263 = sand.u32 %s32, 1
        %s264 = smul.addr %s263, 16
        %s265 = scalar_lea.vmem [#allocation2], %s264
        %p266 = pneg %p45
        %p267 = pneg %p42
        %p268 = pneg %p66
        %p269 = pneg %p63
        %p270 = pneg %p87
        %p271 = pneg %p84
        %p272 = pneg %p108
        %p273 = pneg %p105
        %p274 = pneg %p129
        %p275 = pneg %p126
        %p276 = pneg %p155
        %p277 = pneg %p152
        %s278 = sand.u32 %s142, 1
        %s279 = scalar_lea.sflag [#allocation4], %s278
        %s280 = sand.u32 %s142, 1
        %s281 = smul.addr %s280, 8
        %s282 = scalar_lea.vmem [#allocation10], %s281
        %v284 = vld [vmem:[%s244] sm:$0xff]
        %v285 = vld [vmem:[%s244 + $0x8] sm:$0xff]
        %v286 = vpack.c.bf16 %v284, %v284
        %v287 = vpack.c.bf16 %v285, %v285
        %v288 = vld [vmem:[#allocation5] sm:$0xff]
        %v289 = vld [vmem:[#allocation5 + $0x8] sm:$0xff]
        %v290 = vld [vmem:[#allocation5 + $0x10] sm:$0xff]
        %v291 = vld [vmem:[#allocation5 + $0x18] sm:$0xff]
        %v292 = vld [vmem:[#allocation5 + $0x20] sm:$0xff]
        %v293 = vld [vmem:[#allocation5 + $0x28] sm:$0xff]
        %v294 = vld [vmem:[#allocation5 + $0x30] sm:$0xff]
        %v295 = vld [vmem:[#allocation5 + $0x38] sm:$0xff]
        %v296 = vld [vmem:[#allocation5 + $0x40] sm:$0xff]
        %v297 = vld [vmem:[#allocation5 + $0x48] sm:$0xff]
        %v298 = vld [vmem:[#allocation5 + $0x50] sm:$0xff]
        %v299 = vld [vmem:[#allocation5 + $0x58] sm:$0xff]
        %v300 = vld [vmem:[#allocation5 + $0x60] sm:$0xff]
        %v301 = vld [vmem:[#allocation5 + $0x68] sm:$0xff]
        %v302 = vld [vmem:[#allocation5 + $0x70] sm:$0xff]
        %v303 = vld [vmem:[#allocation5 + $0x78] sm:$0xff]
        %v304 = vld [vmem:[#allocation5 + $0x80] sm:$0xff]
        %v305 = vld [vmem:[#allocation5 + $0x88] sm:$0xff]
        %v306 = vld [vmem:[#allocation5 + $0x90] sm:$0xff]
        %v307 = vld [vmem:[#allocation5 + $0x98] sm:$0xff]
        %v308 = vld [vmem:[#allocation5 + $0xa0] sm:$0xff]
        %v309 = vld [vmem:[#allocation5 + $0xa8] sm:$0xff]
        %v310 = vld [vmem:[#allocation5 + $0xb0] sm:$0xff]
        %v311 = vld [vmem:[#allocation5 + $0xb8] sm:$0xff]
        %v312 = vld [vmem:[#allocation5 + $0xc0] sm:$0xff]
        %v313 = vld [vmem:[#allocation5 + $0xc8] sm:$0xff]
        %v314 = vld [vmem:[#allocation5 + $0xd0] sm:$0xff]
        %v315 = vld [vmem:[#allocation5 + $0xd8] sm:$0xff]
        %v316 = vld [vmem:[#allocation5 + $0xe0] sm:$0xff]
        %v317 = vld [vmem:[#allocation5 + $0xe8] sm:$0xff]
        %v318 = vld [vmem:[#allocation5 + $0xf0] sm:$0xff]
        %v319 = vld [vmem:[#allocation5 + $0xf8] sm:$0xff]
        %v320 = vld [vmem:[#allocation5 + $0x100] sm:$0xff]
        %v321 = vld [vmem:[#allocation5 + $0x108] sm:$0xff]
        %v322 = vld [vmem:[#allocation5 + $0x110] sm:$0xff]
        %v323 = vld [vmem:[#allocation5 + $0x118] sm:$0xff]
        %v324 = vld [vmem:[#allocation5 + $0x120] sm:$0xff]
        %v325 = vld [vmem:[#allocation5 + $0x128] sm:$0xff]
        %v326 = vld [vmem:[#allocation5 + $0x130] sm:$0xff]
        %v327 = vld [vmem:[#allocation5 + $0x138] sm:$0xff]
        %v328 = vld [vmem:[#allocation5 + $0x140] sm:$0xff]
        %v329 = vld [vmem:[#allocation5 + $0x148] sm:$0xff]
        %v330 = vld [vmem:[#allocation5 + $0x150] sm:$0xff]
        %v331 = vld [vmem:[#allocation5 + $0x158] sm:$0xff]
        %v332 = vld [vmem:[#allocation5 + $0x160] sm:$0xff]
        %v333 = vld [vmem:[#allocation5 + $0x168] sm:$0xff]
        %v334 = vld [vmem:[#allocation5 + $0x170] sm:$0xff]
        %v335 = vld [vmem:[#allocation5 + $0x178] sm:$0xff]
        %v336 = vld [vmem:[#allocation5 + $0x180] sm:$0xff]
        %v337 = vld [vmem:[#allocation5 + $0x188] sm:$0xff]
        %v338 = vld [vmem:[#allocation5 + $0x190] sm:$0xff]
        %v339 = vld [vmem:[#allocation5 + $0x198] sm:$0xff]
        %v340 = vld [vmem:[#allocation5 + $0x1a0] sm:$0xff]
        %v341 = vld [vmem:[#allocation5 + $0x1a8] sm:$0xff]
        %v342 = vld [vmem:[#allocation5 + $0x1b0] sm:$0xff]
        %v343 = vld [vmem:[#allocation5 + $0x1b8] sm:$0xff]
        %v344 = vld [vmem:[#allocation5 + $0x1c0] sm:$0xff]
        %v345 = vld [vmem:[#allocation5 + $0x1c8] sm:$0xff]
        %v346 = vld [vmem:[#allocation5 + $0x1d0] sm:$0xff]
        %v347 = vld [vmem:[#allocation5 + $0x1d8] sm:$0xff]
        %v348 = vld [vmem:[#allocation5 + $0x1e0] sm:$0xff]
        %v349 = vld [vmem:[#allocation5 + $0x1e8] sm:$0xff]
        %v350 = vld [vmem:[#allocation5 + $0x1f0] sm:$0xff]
        %v351 = vld [vmem:[#allocation5 + $0x1f8] sm:$0xff]
        %v352 = vld [vmem:[#allocation7] sm:$0xf]
        %v354 = vlaneseq
        %v355 = vshrl.u32 %v354, 7
        %v356 = vsub.s32 0, %v355
        %v357 = vrot.slane %v352, %v356
        %v358 = vlaneseq
        %v359 = vshrl.u32 %v358, 7
        %v360 = vsub.s32 1, %v359
        %v361 = vrot.slane %v352, %v360
        %v362 = vlaneseq
        %v363 = vshrl.u32 %v362, 7
        %v364 = vsub.s32 2, %v363
        %v365 = vrot.slane %v352, %v364
        %v366 = vlaneseq
        %v367 = vshrl.u32 %v366, 7
        %v368 = vsub.s32 3, %v367
        %v369 = vrot.slane %v352, %v368
        %v438 = vunpack.c.l.b16 %v288
        %v439 = vunpack.c.h.b16 %v288
        %v440 = vunpack.c.l.b16 %v289
        %v441 = vunpack.c.h.b16 %v289
        %v442 = vunpack.c.l.b16 %v290
        %v443 = vunpack.c.h.b16 %v290
        %v444 = vunpack.c.l.b16 %v291
        %v445 = vunpack.c.h.b16 %v291
        %v446 = vunpack.c.l.b16 %v292
        %v447 = vunpack.c.h.b16 %v292
        %v448 = vunpack.c.l.b16 %v293
        %v449 = vunpack.c.h.b16 %v293
        %v450 = vunpack.c.l.b16 %v294
        %v451 = vunpack.c.h.b16 %v294
        %v452 = vunpack.c.l.b16 %v295
        %v453 = vunpack.c.h.b16 %v295
        %v454 = vunpack.c.l.b16 %v296
        %v455 = vunpack.c.h.b16 %v296
        %v456 = vunpack.c.l.b16 %v297
        %v457 = vunpack.c.h.b16 %v297
        %v458 = vunpack.c.l.b16 %v298
        %v459 = vunpack.c.h.b16 %v298
        %v460 = vunpack.c.l.b16 %v299
        %v461 = vunpack.c.h.b16 %v299
        %v462 = vunpack.c.l.b16 %v300
        %v463 = vunpack.c.h.b16 %v300
        %v464 = vunpack.c.l.b16 %v301
        %v465 = vunpack.c.h.b16 %v301
        %v466 = vunpack.c.l.b16 %v302
        %v467 = vunpack.c.h.b16 %v302
        %v468 = vunpack.c.l.b16 %v303
        %v469 = vunpack.c.h.b16 %v303
        %v470 = vunpack.c.l.b16 %v304
        %v471 = vunpack.c.h.b16 %v304
        %v472 = vunpack.c.l.b16 %v305
        %v473 = vunpack.c.h.b16 %v305
        %v474 = vunpack.c.l.b16 %v306
        %v475 = vunpack.c.h.b16 %v306
        %v476 = vunpack.c.l.b16 %v307
        %v477 = vunpack.c.h.b16 %v307
        %v478 = vunpack.c.l.b16 %v308
        %v479 = vunpack.c.h.b16 %v308
        %v480 = vunpack.c.l.b16 %v309
        %v481 = vunpack.c.h.b16 %v309
        %v482 = vunpack.c.l.b16 %v310
        %v483 = vunpack.c.h.b16 %v310
        %v484 = vunpack.c.l.b16 %v311
        %v485 = vunpack.c.h.b16 %v311
        %v486 = vunpack.c.l.b16 %v312
        %v487 = vunpack.c.h.b16 %v312
        %v488 = vunpack.c.l.b16 %v313
        %v489 = vunpack.c.h.b16 %v313
        %v490 = vunpack.c.l.b16 %v314
        %v491 = vunpack.c.h.b16 %v314
        %v492 = vunpack.c.l.b16 %v315
        %v493 = vunpack.c.h.b16 %v315
        %v494 = vunpack.c.l.b16 %v316
        %v495 = vunpack.c.h.b16 %v316
        %v496 = vunpack.c.l.b16 %v317
        %v497 = vunpack.c.h.b16 %v317
        %v498 = vunpack.c.l.b16 %v318
        %v499 = vunpack.c.h.b16 %v318
        %v500 = vunpack.c.l.b16 %v319
        %v501 = vunpack.c.h.b16 %v319
        %v502 = vunpack.c.l.b16 %v320
        %v503 = vunpack.c.h.b16 %v320
        %v504 = vunpack.c.l.b16 %v321
        %v505 = vunpack.c.h.b16 %v321
        %v506 = vunpack.c.l.b16 %v322
        %v507 = vunpack.c.h.b16 %v322
        %v508 = vunpack.c.l.b16 %v323
        %v509 = vunpack.c.h.b16 %v323
        %v510 = vunpack.c.l.b16 %v324
        %v511 = vunpack.c.h.b16 %v324
        %v512 = vunpack.c.l.b16 %v325
        %v513 = vunpack.c.h.b16 %v325
        %v514 = vunpack.c.l.b16 %v326
        %v515 = vunpack.c.h.b16 %v326
        %v516 = vunpack.c.l.b16 %v327
        %v517 = vunpack.c.h.b16 %v327
        %v518 = vunpack.c.l.b16 %v328
        %v519 = vunpack.c.h.b16 %v328
        %v520 = vunpack.c.l.b16 %v329
        %v521 = vunpack.c.h.b16 %v329
        %v522 = vunpack.c.l.b16 %v330
        %v523 = vunpack.c.h.b16 %v330
        %v524 = vunpack.c.l.b16 %v331
        %v525 = vunpack.c.h.b16 %v331
        %v526 = vunpack.c.l.b16 %v332
        %v527 = vunpack.c.h.b16 %v332
        %v528 = vunpack.c.l.b16 %v333
        %v529 = vunpack.c.h.b16 %v333
        %v530 = vunpack.c.l.b16 %v334
        %v531 = vunpack.c.h.b16 %v334
        %v532 = vunpack.c.l.b16 %v335
        %v533 = vunpack.c.h.b16 %v335
        %v534 = vunpack.c.l.b16 %v336
        %v535 = vunpack.c.h.b16 %v336
        %v536 = vunpack.c.l.b16 %v337
        %v537 = vunpack.c.h.b16 %v337
        %v538 = vunpack.c.l.b16 %v338
        %v539 = vunpack.c.h.b16 %v338
        %v540 = vunpack.c.l.b16 %v339
        %v541 = vunpack.c.h.b16 %v339
        %v542 = vunpack.c.l.b16 %v340
        %v543 = vunpack.c.h.b16 %v340
        %v544 = vunpack.c.l.b16 %v341
        %v545 = vunpack.c.h.b16 %v341
        %v546 = vunpack.c.l.b16 %v342
        %v547 = vunpack.c.h.b16 %v342
        %v548 = vunpack.c.l.b16 %v343
        %v549 = vunpack.c.h.b16 %v343
        %v550 = vunpack.c.l.b16 %v344
        %v551 = vunpack.c.h.b16 %v344
        %v552 = vunpack.c.l.b16 %v345
        %v553 = vunpack.c.h.b16 %v345
        %v554 = vunpack.c.l.b16 %v346
        %v555 = vunpack.c.h.b16 %v346
        %v556 = vunpack.c.l.b16 %v347
        %v557 = vunpack.c.h.b16 %v347
        %v558 = vunpack.c.l.b16 %v348
        %v559 = vunpack.c.h.b16 %v348
        %v560 = vunpack.c.l.b16 %v349
        %v561 = vunpack.c.h.b16 %v349
        %v562 = vunpack.c.l.b16 %v350
        %v563 = vunpack.c.h.b16 %v350
        %v564 = vunpack.c.l.b16 %v351
        %v565 = vunpack.c.h.b16 %v351
        %v566 = vpack.c.b16 %v442, %v438
        %v567 = vpack.c.b16 %v443, %v439
        %v568 = vpack.c.b16 %v444, %v440
        %v569 = vpack.c.b16 %v445, %v441
        %v570 = vpack.c.b16 %v450, %v446
        %v571 = vpack.c.b16 %v451, %v447
        %v572 = vpack.c.b16 %v452, %v448
        %v573 = vpack.c.b16 %v453, %v449
        %v574 = vpack.c.b16 %v458, %v454
        %v575 = vpack.c.b16 %v459, %v455
        %v576 = vpack.c.b16 %v460, %v456
        %v577 = vpack.c.b16 %v461, %v457
        %v578 = vpack.c.b16 %v466, %v462
        %v579 = vpack.c.b16 %v467, %v463
        %v580 = vpack.c.b16 %v468, %v464
        %v581 = vpack.c.b16 %v469, %v465
        %v582 = vpack.c.b16 %v474, %v470
        %v583 = vpack.c.b16 %v475, %v471
        %v584 = vpack.c.b16 %v476, %v472
        %v585 = vpack.c.b16 %v477, %v473
        %v586 = vpack.c.b16 %v482, %v478
        %v587 = vpack.c.b16 %v483, %v479
        %v588 = vpack.c.b16 %v484, %v480
        %v589 = vpack.c.b16 %v485, %v481
        %v590 = vpack.c.b16 %v490, %v486
        %v591 = vpack.c.b16 %v491, %v487
        %v592 = vpack.c.b16 %v492, %v488
        %v593 = vpack.c.b16 %v493, %v489
        %v594 = vpack.c.b16 %v498, %v494
        %v595 = vpack.c.b16 %v499, %v495
        %v596 = vpack.c.b16 %v500, %v496
        %v597 = vpack.c.b16 %v501, %v497
        %v598 = vpack.c.b16 %v506, %v502
        %v599 = vpack.c.b16 %v507, %v503
        %v600 = vpack.c.b16 %v508, %v504
        %v601 = vpack.c.b16 %v509, %v505
        %v602 = vpack.c.b16 %v514, %v510
        %v603 = vpack.c.b16 %v515, %v511
        %v604 = vpack.c.b16 %v516, %v512
        %v605 = vpack.c.b16 %v517, %v513
        %v606 = vpack.c.b16 %v522, %v518
        %v607 = vpack.c.b16 %v523, %v519
        %v608 = vpack.c.b16 %v524, %v520
        %v609 = vpack.c.b16 %v525, %v521
        %v610 = vpack.c.b16 %v530, %v526
        %v611 = vpack.c.b16 %v531, %v527
        %v612 = vpack.c.b16 %v532, %v528
        %v613 = vpack.c.b16 %v533, %v529
        %v614 = vpack.c.b16 %v538, %v534
        %v615 = vpack.c.b16 %v539, %v535
        %v616 = vpack.c.b16 %v540, %v536
        %v617 = vpack.c.b16 %v541, %v537
        %v618 = vpack.c.b16 %v546, %v542
        %v619 = vpack.c.b16 %v547, %v543
        %v620 = vpack.c.b16 %v548, %v544
        %v621 = vpack.c.b16 %v549, %v545
        %v622 = vpack.c.b16 %v554, %v550
        %v623 = vpack.c.b16 %v555, %v551
        %v624 = vpack.c.b16 %v556, %v552
        %v625 = vpack.c.b16 %v557, %v553
        %v626 = vpack.c.b16 %v562, %v558
        %v627 = vpack.c.b16 %v563, %v559
        %v628 = vpack.c.b16 %v564, %v560
        %v629 = vpack.c.b16 %v565, %v561
        %694 = vmatprep.subr.bf16.mxu0 %v595
        %695 = vmatpush1.bf16.msra.mxu0 %v594
        %696 = vmatprep.subr.bf16.mxu0 %v591
        %697 = vmatpush1.bf16.msra.mxu0 %v590
        %698 = vmatprep.subr.bf16.mxu0 %v587
        %699 = vmatpush1.bf16.msra.mxu0 %v586
        %700 = vmatprep.subr.bf16.mxu0 %v583
        %701 = vmatpush1.bf16.msra.mxu0 %v582
        %702 = vmatprep.subr.bf16.mxu0 %v579
        %703 = vmatpush1.bf16.msra.mxu0 %v578
        %704 = vmatprep.subr.bf16.mxu0 %v575
        %705 = vmatpush1.bf16.msra.mxu0 %v574
        %706 = vmatprep.subr.bf16.mxu0 %v571
        %707 = vmatpush1.bf16.msra.mxu0 %v570
        %708 = vmatprep.subr.bf16.mxu0 %v567
        %709 = vmatpush1.bf16.msra.mxu0 %v566
        %710 = vmatprep.subr.bf16.mxu0 %v627
        %711 = vmatpush2.bf16.msra.mxu0 %v626
        %712 = vmatprep.subr.bf16.mxu0 %v623
        %713 = vmatpush2.bf16.msra.mxu0 %v622
        %714 = vmatprep.subr.bf16.mxu0 %v619
        %715 = vmatpush2.bf16.msra.mxu0 %v618
        %716 = vmatprep.subr.bf16.mxu0 %v615
        %717 = vmatpush2.bf16.msra.mxu0 %v614
        %718 = vmatprep.subr.bf16.mxu0 %v611
        %719 = vmatpush2.bf16.msra.mxu0 %v610
        %720 = vmatprep.subr.bf16.mxu0 %v607
        %721 = vmatpush2.bf16.msra.mxu0 %v606
        %722 = vmatprep.subr.bf16.mxu0 %v603
        %723 = vmatpush2.bf16.msra.mxu0 %v602
        %724 = vmatprep.subr.bf16.mxu0 %v599
        %725 = vmatpush2.bf16.msra.mxu0 %v598
        %726 = vmatprep.mubr.bf16.mxu0 %v287
        %727 = vmatmul.mubr.bf16.gmra.mxu0 %v286
        %v728 = vpop.f32.mrf.mxu0
        %v729 = vadd.f32 %v357, %v728
        %v730 = vpop.f32.mrf.mxu0
        %v731 = vadd.f32 %v361, %v730
        %v732 = vpop.f32.mrf.mxu0
        %v733 = vpop.f32.mrf.mxu0
        %734 = vdwg.mxu0
        %735 = vmatprep.subr.bf16.mxu0 %v597
        %736 = vmatpush1.bf16.msra.mxu0 %v596
        %737 = vmatprep.subr.bf16.mxu0 %v593
        %738 = vmatpush1.bf16.msra.mxu0 %v592
        %739 = vmatprep.subr.bf16.mxu0 %v589
        %740 = vmatpush1.bf16.msra.mxu0 %v588
        %741 = vmatprep.subr.bf16.mxu0 %v585
        %742 = vmatpush1.bf16.msra.mxu0 %v584
        %743 = vmatprep.subr.bf16.mxu0 %v581
        %744 = vmatpush1.bf16.msra.mxu0 %v580
        %745 = vmatprep.subr.bf16.mxu0 %v577
        %746 = vmatpush1.bf16.msra.mxu0 %v576
        %747 = vmatprep.subr.bf16.mxu0 %v573
        %748 = vmatpush1.bf16.msra.mxu0 %v572
        %749 = vmatprep.subr.bf16.mxu0 %v569
        %750 = vmatpush1.bf16.msra.mxu0 %v568
        %751 = vmatprep.subr.bf16.mxu0 %v629
        %752 = vmatpush2.bf16.msra.mxu0 %v628
        %753 = vmatprep.subr.bf16.mxu0 %v625
        %754 = vmatpush2.bf16.msra.mxu0 %v624
        %755 = vmatprep.subr.bf16.mxu0 %v621
        %756 = vmatpush2.bf16.msra.mxu0 %v620
        %757 = vmatprep.subr.bf16.mxu0 %v617
        %758 = vmatpush2.bf16.msra.mxu0 %v616
        %759 = vmatprep.subr.bf16.mxu0 %v613
        %760 = vmatpush2.bf16.msra.mxu0 %v612
        %761 = vmatprep.subr.bf16.mxu0 %v609
        %762 = vmatpush2.bf16.msra.mxu0 %v608
        %763 = vmatprep.subr.bf16.mxu0 %v605
        %764 = vmatpush2.bf16.msra.mxu0 %v604
        %765 = vmatprep.subr.bf16.mxu0 %v601
        %766 = vmatpush2.bf16.msra.mxu0 %v600
        %767 = vmatprep.mubr.bf16.mxu0 %v287
        %768 = vmatmul.mubr.bf16.gmra.mxu0 %v286
        %v769 = vpop.f32.mrf.mxu0
        %v770 = vadd.f32 %v365, %v769
        %v771 = vpop.f32.mrf.mxu0
        %v772 = vadd.f32 %v369, %v771
        %v773 = vpop.f32.mrf.mxu0
        %v774 = vpop.f32.mrf.mxu0
        %775 = vdwg.mxu0
        %v776 = vmax.f32 %v729, 0.0
        %v777 = vmax.f32 %v731, 0.0
        %v778 = vmax.f32 %v770, 0.0
        %v779 = vmax.f32 %v772, 0.0
        %v780 = vpack.c.bf16 %v776, %v776
        %v781 = vpack.c.bf16 %v777, %v777
        %v782 = vpack.c.bf16 %v778, %v778
        %v783 = vpack.c.bf16 %v779, %v779
        %v784 = vld [vmem:[#allocation8] sm:$0xf]
        %v785 = vld [vmem:[#allocation8 + $0x4] sm:$0xf]
        %v786 = vld [vmem:[#allocation8 + $0x8] sm:$0xf]
        %v787 = vld [vmem:[#allocation8 + $0xc] sm:$0xf]
        %v788 = vld [vmem:[#allocation8 + $0x10] sm:$0xf]
        %v789 = vld [vmem:[#allocation8 + $0x14] sm:$0xf]
        %v790 = vld [vmem:[#allocation8 + $0x18] sm:$0xf]
        %v791 = vld [vmem:[#allocation8 + $0x1c] sm:$0xf]
        %v792 = vld [vmem:[#allocation8 + $0x20] sm:$0xf]
        %v793 = vld [vmem:[#allocation8 + $0x24] sm:$0xf]
        %v794 = vld [vmem:[#allocation8 + $0x28] sm:$0xf]
        %v795 = vld [vmem:[#allocation8 + $0x2c] sm:$0xf]
        %v796 = vld [vmem:[#allocation8 + $0x30] sm:$0xf]
        %v797 = vld [vmem:[#allocation8 + $0x34] sm:$0xf]
        %v798 = vld [vmem:[#allocation8 + $0x38] sm:$0xf]
        %v799 = vld [vmem:[#allocation8 + $0x3c] sm:$0xf]
        %v800 = vld [vmem:[#allocation8 + $0x40] sm:$0xf]
        %v801 = vld [vmem:[#allocation8 + $0x44] sm:$0xf]
        %v802 = vld [vmem:[#allocation8 + $0x48] sm:$0xf]
        %v803 = vld [vmem:[#allocation8 + $0x4c] sm:$0xf]
        %v804 = vld [vmem:[#allocation8 + $0x50] sm:$0xf]
        %v805 = vld [vmem:[#allocation8 + $0x54] sm:$0xf]
        %v806 = vld [vmem:[#allocation8 + $0x58] sm:$0xf]
        %v807 = vld [vmem:[#allocation8 + $0x5c] sm:$0xf]
        %v808 = vld [vmem:[#allocation8 + $0x60] sm:$0xf]
        %v809 = vld [vmem:[#allocation8 + $0x64] sm:$0xf]
        %v810 = vld [vmem:[#allocation8 + $0x68] sm:$0xf]
        %v811 = vld [vmem:[#allocation8 + $0x6c] sm:$0xf]
        %v812 = vld [vmem:[#allocation8 + $0x70] sm:$0xf]
        %v813 = vld [vmem:[#allocation8 + $0x74] sm:$0xf]
        %v814 = vld [vmem:[#allocation8 + $0x78] sm:$0xf]
        %v815 = vld [vmem:[#allocation8 + $0x7c] sm:$0xf]
        %v816 = vld [vmem:[#allocation8 + $0x80] sm:$0xf]
        %v817 = vld [vmem:[#allocation8 + $0x84] sm:$0xf]
        %v818 = vld [vmem:[#allocation8 + $0x88] sm:$0xf]
        %v819 = vld [vmem:[#allocation8 + $0x8c] sm:$0xf]
        %v820 = vld [vmem:[#allocation8 + $0x90] sm:$0xf]
        %v821 = vld [vmem:[#allocation8 + $0x94] sm:$0xf]
        %v822 = vld [vmem:[#allocation8 + $0x98] sm:$0xf]
        %v823 = vld [vmem:[#allocation8 + $0x9c] sm:$0xf]
        %v824 = vld [vmem:[#allocation8 + $0xa0] sm:$0xf]
        %v825 = vld [vmem:[#allocation8 + $0xa4] sm:$0xf]
        %v826 = vld [vmem:[#allocation8 + $0xa8] sm:$0xf]
        %v827 = vld [vmem:[#allocation8 + $0xac] sm:$0xf]
        %v828 = vld [vmem:[#allocation8 + $0xb0] sm:$0xf]
        %v829 = vld [vmem:[#allocation8 + $0xb4] sm:$0xf]
        %v830 = vld [vmem:[#allocation8 + $0xb8] sm:$0xf]
        %v831 = vld [vmem:[#allocation8 + $0xbc] sm:$0xf]
        %v832 = vld [vmem:[#allocation8 + $0xc0] sm:$0xf]
        %v833 = vld [vmem:[#allocation8 + $0xc4] sm:$0xf]
        %v834 = vld [vmem:[#allocation8 + $0xc8] sm:$0xf]
        %v835 = vld [vmem:[#allocation8 + $0xcc] sm:$0xf]
        %v836 = vld [vmem:[#allocation8 + $0xd0] sm:$0xf]
        %v837 = vld [vmem:[#allocation8 + $0xd4] sm:$0xf]
        %v838 = vld [vmem:[#allocation8 + $0xd8] sm:$0xf]
        %v839 = vld [vmem:[#allocation8 + $0xdc] sm:$0xf]
        %v840 = vld [vmem:[#allocation8 + $0xe0] sm:$0xf]
        %v841 = vld [vmem:[#allocation8 + $0xe4] sm:$0xf]
        %v842 = vld [vmem:[#allocation8 + $0xe8] sm:$0xf]
        %v843 = vld [vmem:[#allocation8 + $0xec] sm:$0xf]
        %v844 = vld [vmem:[#allocation8 + $0xf0] sm:$0xf]
        %v845 = vld [vmem:[#allocation8 + $0xf4] sm:$0xf]
        %v846 = vld [vmem:[#allocation8 + $0xf8] sm:$0xf]
        %v847 = vld [vmem:[#allocation8 + $0xfc] sm:$0xf]
        %v848 = vld [vmem:[%s4] sm:$0x1]
        %v850 = vlaneseq
        %v851 = vshrl.u32 %v850, 7
        %v852 = vsub.s32 0, %v851
        %v853 = vrot.slane %v848, %v852
        %v919 = vunpack.c.l.b16 %v784
        %v920 = vunpack.c.l.b16 %v785
        %v921 = vunpack.c.l.b16 %v786
        %v922 = vunpack.c.l.b16 %v787
        %v923 = vunpack.c.l.b16 %v788
        %v924 = vunpack.c.l.b16 %v789
        %v925 = vunpack.c.l.b16 %v790
        %v926 = vunpack.c.l.b16 %v791
        %v927 = vunpack.c.l.b16 %v792
        %v928 = vunpack.c.l.b16 %v793
        %v929 = vunpack.c.l.b16 %v794
        %v930 = vunpack.c.l.b16 %v795
        %v931 = vunpack.c.l.b16 %v796
        %v932 = vunpack.c.l.b16 %v797
        %v933 = vunpack.c.l.b16 %v798
        %v934 = vunpack.c.l.b16 %v799
        %v935 = vunpack.c.l.b16 %v800
        %v936 = vunpack.c.l.b16 %v801
        %v937 = vunpack.c.l.b16 %v802
        %v938 = vunpack.c.l.b16 %v803
        %v939 = vunpack.c.l.b16 %v804
        %v940 = vunpack.c.l.b16 %v805
        %v941 = vunpack.c.l.b16 %v806
        %v942 = vunpack.c.l.b16 %v807
        %v943 = vunpack.c.l.b16 %v808
        %v944 = vunpack.c.l.b16 %v809
        %v945 = vunpack.c.l.b16 %v810
        %v946 = vunpack.c.l.b16 %v811
        %v947 = vunpack.c.l.b16 %v812
        %v948 = vunpack.c.l.b16 %v813
        %v949 = vunpack.c.l.b16 %v814
        %v950 = vunpack.c.l.b16 %v815
        %v951 = vunpack.c.l.b16 %v816
        %v952 = vunpack.c.l.b16 %v817
        %v953 = vunpack.c.l.b16 %v818
        %v954 = vunpack.c.l.b16 %v819
        %v955 = vunpack.c.l.b16 %v820
        %v956 = vunpack.c.l.b16 %v821
        %v957 = vunpack.c.l.b16 %v822
        %v958 = vunpack.c.l.b16 %v823
        %v959 = vunpack.c.l.b16 %v824
        %v960 = vunpack.c.l.b16 %v825
        %v961 = vunpack.c.l.b16 %v826
        %v962 = vunpack.c.l.b16 %v827
        %v963 = vunpack.c.l.b16 %v828
        %v964 = vunpack.c.l.b16 %v829
        %v965 = vunpack.c.l.b16 %v830
        %v966 = vunpack.c.l.b16 %v831
        %v967 = vunpack.c.l.b16 %v832
        %v968 = vunpack.c.l.b16 %v833
        %v969 = vunpack.c.l.b16 %v834
        %v970 = vunpack.c.l.b16 %v835
        %v971 = vunpack.c.l.b16 %v836
        %v972 = vunpack.c.l.b16 %v837
        %v973 = vunpack.c.l.b16 %v838
        %v974 = vunpack.c.l.b16 %v839
        %v975 = vunpack.c.l.b16 %v840
        %v976 = vunpack.c.l.b16 %v841
        %v977 = vunpack.c.l.b16 %v842
        %v978 = vunpack.c.l.b16 %v843
        %v979 = vunpack.c.l.b16 %v844
        %v980 = vunpack.c.l.b16 %v845
        %v981 = vunpack.c.l.b16 %v846
        %v982 = vunpack.c.l.b16 %v847
        %v983 = vpack.c.b16 %v920, %v919
        %v984 = vpack.c.b16 %v922, %v921
        %v985 = vpack.c.b16 %v924, %v923
        %v986 = vpack.c.b16 %v926, %v925
        %v987 = vpack.c.b16 %v928, %v927
        %v988 = vpack.c.b16 %v930, %v929
        %v989 = vpack.c.b16 %v932, %v931
        %v990 = vpack.c.b16 %v934, %v933
        %v991 = vpack.c.b16 %v936, %v935
        %v992 = vpack.c.b16 %v938, %v937
        %v993 = vpack.c.b16 %v940, %v939
        %v994 = vpack.c.b16 %v942, %v941
        %v995 = vpack.c.b16 %v944, %v943
        %v996 = vpack.c.b16 %v946, %v945
        %v997 = vpack.c.b16 %v948, %v947
        %v998 = vpack.c.b16 %v950, %v949
        %v999 = vpack.c.b16 %v952, %v951
        %v1000 = vpack.c.b16 %v954, %v953
        %v1001 = vpack.c.b16 %v956, %v955
        %v1002 = vpack.c.b16 %v958, %v957
        %v1003 = vpack.c.b16 %v960, %v959
        %v1004 = vpack.c.b16 %v962, %v961
        %v1005 = vpack.c.b16 %v964, %v963
        %v1006 = vpack.c.b16 %v966, %v965
        %v1007 = vpack.c.b16 %v968, %v967
        %v1008 = vpack.c.b16 %v970, %v969
        %v1009 = vpack.c.b16 %v972, %v971
        %v1010 = vpack.c.b16 %v974, %v973
        %v1011 = vpack.c.b16 %v976, %v975
        %v1012 = vpack.c.b16 %v978, %v977
        %v1013 = vpack.c.b16 %v980, %v979
        %v1014 = vpack.c.b16 %v982, %v981
        %1047 = vmatprep.subr.bf16.mxu0 0
        %1048 = vmatpush1.bf16.msra.mxu0 %v990
        %1049 = vmatprep.subr.bf16.mxu0 0
        %1050 = vmatpush1.bf16.msra.mxu0 %v989
        %1051 = vmatprep.subr.bf16.mxu0 0
        %1052 = vmatpush1.bf16.msra.mxu0 %v988
        %1053 = vmatprep.subr.bf16.mxu0 0
        %1054 = vmatpush1.bf16.msra.mxu0 %v987
        %1055 = vmatprep.subr.bf16.mxu0 0
        %1056 = vmatpush1.bf16.msra.mxu0 %v986
        %1057 = vmatprep.subr.bf16.mxu0 0
        %1058 = vmatpush1.bf16.msra.mxu0 %v985
        %1059 = vmatprep.subr.bf16.mxu0 0
        %1060 = vmatpush1.bf16.msra.mxu0 %v984
        %1061 = vmatprep.subr.bf16.mxu0 0
        %1062 = vmatpush1.bf16.msra.mxu0 %v983
        %1063 = vmatprep.subr.bf16.mxu0 0
        %1064 = vmatpush2.bf16.msra.mxu0 %v998
        %1065 = vmatprep.subr.bf16.mxu0 0
        %1066 = vmatpush2.bf16.msra.mxu0 %v997
        %1067 = vmatprep.subr.bf16.mxu0 0
        %1068 = vmatpush2.bf16.msra.mxu0 %v996
        %1069 = vmatprep.subr.bf16.mxu0 0
        %1070 = vmatpush2.bf16.msra.mxu0 %v995
        %1071 = vmatprep.subr.bf16.mxu0 0
        %1072 = vmatpush2.bf16.msra.mxu0 %v994
        %1073 = vmatprep.subr.bf16.mxu0 0
        %1074 = vmatpush2.bf16.msra.mxu0 %v993
        %1075 = vmatprep.subr.bf16.mxu0 0
        %1076 = vmatpush2.bf16.msra.mxu0 %v992
        %1077 = vmatprep.subr.bf16.mxu0 0
        %1078 = vmatpush2.bf16.msra.mxu0 %v991
        %1079 = vmatprep.mubr.bf16.mxu0 %v781
        %1080 = vmatmul.mubr.bf16.gmra.mxu0 %v780
        %v1081 = vpop.f32.mrf.mxu0
        %v1082 = vadd.f32 %v853, %v1081
        %v1083 = vpop.f32.mrf.mxu0
        %v1084 = vpop.f32.mrf.mxu0
        %v1085 = vpop.f32.mrf.mxu0
        %1086 = vdwg.mxu0
        %1087 = vmatprep.subr.bf16.mxu0 0
        %1088 = vmatpush1.bf16.msra.mxu0 %v1006
        %1089 = vmatprep.subr.bf16.mxu0 0
        %1090 = vmatpush1.bf16.msra.mxu0 %v1005
        %1091 = vmatprep.subr.bf16.mxu0 0
        %1092 = vmatpush1.bf16.msra.mxu0 %v1004
        %1093 = vmatprep.subr.bf16.mxu0 0
        %1094 = vmatpush1.bf16.msra.mxu0 %v1003
        %1095 = vmatprep.subr.bf16.mxu0 0
        %1096 = vmatpush1.bf16.msra.mxu0 %v1002
        %1097 = vmatprep.subr.bf16.mxu0 0
        %1098 = vmatpush1.bf16.msra.mxu0 %v1001
        %1099 = vmatprep.subr.bf16.mxu0 0
        %1100 = vmatpush1.bf16.msra.mxu0 %v1000
        %1101 = vmatprep.subr.bf16.mxu0 0
        %1102 = vmatpush1.bf16.msra.mxu0 %v999
        %1103 = vmatprep.subr.bf16.mxu0 0
        %1104 = vmatpush2.bf16.msra.mxu0 %v1014
        %1105 = vmatprep.subr.bf16.mxu0 0
        %1106 = vmatpush2.bf16.msra.mxu0 %v1013
        %1107 = vmatprep.subr.bf16.mxu0 0
        %1108 = vmatpush2.bf16.msra.mxu0 %v1012
        %1109 = vmatprep.subr.bf16.mxu0 0
        %1110 = vmatpush2.bf16.msra.mxu0 %v1011
        %1111 = vmatprep.subr.bf16.mxu0 0
        %1112 = vmatpush2.bf16.msra.mxu0 %v1010
        %1113 = vmatprep.subr.bf16.mxu0 0
        %1114 = vmatpush2.bf16.msra.mxu0 %v1009
        %1115 = vmatprep.subr.bf16.mxu0 0
        %1116 = vmatpush2.bf16.msra.mxu0 %v1008
        %1117 = vmatprep.subr.bf16.mxu0 0
        %1118 = vmatpush2.bf16.msra.mxu0 %v1007
        %1119 = vmatprep.mubr.bf16.mxu0 %v783
        %1120 = vmatmul.mubr.bf16.gmra.mxu0 %v782
        %v1121 = vpop.f32.mrf.mxu0
        %v1122 = vadd.f32 %v1082, %v1121
        %v1123 = vpop.f32.mrf.mxu0
        %v1124 = vpop.f32.mrf.mxu0
        %v1125 = vpop.f32.mrf.mxu0
        %1126 = vdwg.mxu0
        %1127 = vst [vmem:[%s282] sm:$0xff] %v1122
        %s1128 = sand.u32 %s142, 1
        %s1129 = scalar_lea.sflag [#allocation4], %s1128
        %s1130 = sand.u32 %s142, 1
        %s1131 = smul.addr %s1130, 8
        %s1132 = scalar_lea.vmem [#allocation10], %s1131
        // Predicated region
        $region57: #{tpu_custom_call.1} parent=39 // pred_check
          %p1133 = pneg %p152
        $region58: #{tpu_custom_call.1} parent=39 // pred_check_branch
          %1135 = sbr.rel (%p1133) target = $region60
        $region59: #{tpu_custom_call.1} parent=39 // pred_region
          %s1137 = ssub.s32 128, 128
          %1138 = vsyncadd %s1129, %s1137
          %s1139 = smul.addr %s24, 128
          %s1140 = scalar_lea.hbm %s5, %s1139
          %s1142 = sshll.u32 %s1132, 4
          %s1143 = int_to_ptr.vmem [resolvable:$true] %s1142
          %1145 = dma.vmem_to_hbm [thread:$0]  %s1143, 128, %s1140, %s1129
        $region60: #{tpu_custom_call.1} parent=39 // pred_fallthru
          _
      $region40: #{tpu_custom_call.1} parent=5 // pred_fallthru
        _
      %p1146 = scmp.le.s32.totalorder 2, %s19
      // Predicated region
      $region61: #{tpu_custom_call.1} parent=5 // pred_check
        %p1147 = pneg %p1146
      $region62: #{tpu_custom_call.1} parent=5 // pred_check_branch
        %1149 = sbr.rel (%p1147) target = $region64
      $region63: #{tpu_custom_call.1} parent=5 // pred_region
        %s1150 = ssub.s32 %s19, 2
        // Predicated region
        $region65: #{tpu_custom_call.1} parent=63 // pred_check
          %p1151 = pneg %p158
        $region66: #{tpu_custom_call.1} parent=63 // pred_check_branch
          %1153 = sbr.rel (%p1151) target = $region68
        $region67: #{tpu_custom_call.1} parent=63 // pred_region
          %s1154 = sand.u32 %s143, 1
          %s1155 = scalar_lea.sflag [#allocation4], %s1154
          %s1156 = sand.u32 %s143, 1
          %s1157 = smul.addr %s1156, 8
          %s1158 = scalar_lea.vmem [#allocation10], %s1157
          %1159 = dma.done %s1155, 128
        $region68: #{tpu_custom_call.1} parent=63 // pred_fallthru
          _
      $region64: #{tpu_custom_call.1} parent=5 // pred_fallthru
        _
    $region6: #{tpu_custom_call.1} parent=1 // loop_footer
      %s23 = sadd.s32 1, %s19
    $region7: #{tpu_custom_call.1} parent=1 // loop_footer_branch
      %18 = sbr.rel target = $region3
    $region8: #{tpu_custom_call.1} parent=1 // loop_exit
      _
    %1160 = vsyncpa [#allocation3], 1
    %s1161 = scalar_lea.sflag [#allocation3], 1
    %1162 = vsyncpa %s1161, 1
    %1163 = vsyncpa [#allocation6], 1
    %1164 = vsyncpa [#allocation9], 1
    %1165 = vsyncpa [#allocation4], 1
    %s1166 = scalar_lea.sflag [#allocation4], 1
    %1167 = vsyncpa %s1166, 1

</llo_original>
